<compile_context>
chip_gen: v6e
topology: v6e:2x2x1
jax: 0.10.0
libtpu: 0.0.40
codegen_flags: <defaults>
</compile_context>

<pallas_src>
import dataclasses
from functools import partial
from typing import Any

import jax
import jax.numpy as jnp
from jax.experimental import pallas as pl
from jax.experimental.pallas import tpu as pltpu


def _round_up(x, m):
    return ((x + m - 1) // m) * m


def _vmem_budget_bytes():
    """Usable-VMEM budget with headroom for compiler scratch (generation-aware)."""
    cap = 64 << 20  # conservative fallback: v7x per-TensorCore physical VMEM
    try:
        info = pltpu.get_tpu_info()
        c = getattr(info, "vmem_capacity_bytes", None)
        if c:
            cap = int(c)
    except Exception:
        pass
    return (cap * 3) // 4  # ~48 MiB on v7x, ~96 MiB on v5e/v6e


@dataclasses.dataclass(frozen=True)
class MLPPlan:
    H: int
    F: int
    Hp: int            # hidden, padded lane-dense (multiple of 128)
    Fp: int            # ffn, padded to a multiple of TF
    TF: int            # ffn chunk (== Fp when weights are resident)
    resident: bool     # weights held fully VMEM-resident (no k grid axis)
    compute_dtype: Any
    ts_max: int
    vmem_limit: int


def plan_mlp(H, F, *, compute_dtype=jnp.bfloat16, ts_max=512, tf_max=2048,
             force_stream=False):
    nb = jnp.dtype(compute_dtype).itemsize
    budget = _vmem_budget_bytes()
    Hp = _round_up(H, 128)
    ts = max(8, min(ts_max, 512))  # budgeting ceiling for the seq tile

    # --- Regime A: weights fully VMEM-resident (no reduction grid axis). ---
    Fp_res = _round_up(F, 128)
    resident_bytes = (
        2 * 2 * Hp * Fp_res * nb      # w1 + w2 (count double buffers, conservative)
        + 2 * (Fp_res + Hp) * nb      # biases
        + 2 * 2 * ts * Hp * nb        # x tile + out tile, double-buffered
        + ts * Fp_res * 4             # (TS, Fp) f32 intermediate
    )
    if not force_stream and resident_bytes <= budget:
        return MLPPlan(H, F, Hp, Fp_res, Fp_res, True, compute_dtype, ts_max, budget)

    # --- Regime B: stream w1/w2 chunks over an FFN (k) reduction axis. ---
    tf = max(128, min(_round_up(tf_max, 128), _round_up(F, 128)))
    while tf > 128:
        Fp = _round_up(F, tf)
        stream_bytes = (
            2 * 2 * Hp * tf * nb      # w1 chunk + w2 chunk, double-buffered
            + 2 * (Fp + Hp) * nb      # b1 (resident, full Fp) + b2
            + 2 * 2 * ts * Hp * nb    # x + out tiles
            + ts * Hp * 4             # f32 accumulator scratch
            + ts * tf * 4             # (TS, TF) f32 intermediate
        )
        if stream_bytes <= budget:
            break
        tf -= 128
    Fp = _round_up(F, tf)
    return MLPPlan(H, F, Hp, Fp, tf, False, compute_dtype, ts_max, budget)


def prepare_params(params, plan):
    """Pad + cast the weights ONCE (outside the per-call / remat path).

    Zero padding is exact: padded H columns of x contribute 0 to the first
    contraction; padded FFN columns give relu(0 + 0) = 0 feeding zero rows of
    w2; padded output columns are sliced off by the caller.
    """
    w1, b1, w2, b2 = params
    dt = plan.compute_dtype
    H, F, Hp, Fp, TF = plan.H, plan.F, plan.Hp, plan.Fp, plan.TF
    w1p = jnp.zeros((Hp, Fp), dt).at[:H, :F].set(w1.astype(dt))
    b1p = jnp.zeros((1, Fp), dt).at[:, :F].set(b1.astype(dt))
    w2p = jnp.zeros((Fp, Hp), dt).at[:F, :H].set(w2.astype(dt))
    b2p = jnp.zeros((1, Hp), dt).at[:, :H].set(b2.astype(dt))
    if not plan.resident:
        # Pre-block w1 so each k chunk is one contiguous DMA:
        # (Hp, Fp) -> (Kt, Hp, TF).
        kt = Fp // TF
        w1p = w1p.reshape(Hp, kt, TF).transpose(1, 0, 2)
    return (w1p, b1p, w2p, b2p)


def _mlp_resident_kernel(x_ref, w1_ref, b1_ref, w2_ref, b2_ref, o_ref):
    # grid = (seq tile i [parallel],) ; weights are VMEM-resident blocks.
    x = x_ref[...]
    h = jnp.dot(x, w1_ref[...], preferred_element_type=jnp.float32)
    h = jnp.maximum(h + b1_ref[...].astype(jnp.float32), 0.0)
    o = jnp.dot(h.astype(x.dtype), w2_ref[...], preferred_element_type=jnp.float32)
    o_ref[...] = (o + b2_ref[...].astype(jnp.float32)).astype(o_ref.dtype)


def _make_stream_kernel(tf):
    def kernel(x_ref, w1_ref, b1_ref, w2_ref, b2_ref, o_ref, acc_ref):
        # grid = (seq tile i [parallel], ffn chunk k [reduction, innermost]).
        k = pl.program_id(1)

        @pl.when(k == 0)
        def _init():
            acc_ref[...] = jnp.zeros_like(acc_ref)

        x = x_ref[...]
        # First linear chunk: [TS, Hp] @ [Hp, TF] -> [TS, TF], f32 on the MXU.
        h = jnp.dot(x, w1_ref[0], preferred_element_type=jnp.float32)
        # b1 is fully resident; slice the active chunk (lane-aligned start).
        b1 = b1_ref[:, pl.ds(pl.multiple_of(k * tf, 128), tf)]
        h = jnp.maximum(h + b1.astype(jnp.float32), 0.0)
        # Second linear, accumulated over chunks: [TS, TF] @ [TF, Hp] -> [TS, Hp].
        acc_ref[...] += jnp.dot(h.astype(x.dtype), w2_ref[...],
                                preferred_element_type=jnp.float32)

        @pl.when(k == pl.num_programs(1) - 1)
        def _finalize():
            o_ref[...] = (acc_ref[...] + b2_ref[...].astype(jnp.float32)
                          ).astype(o_ref.dtype)
    return kernel


def _mlp_pallas_padded(xp, w1p, b1p, w2p, b2p, *, plan, ts, out_dtype):
    """Padded MLP: xp is (Sp, Hp) in compute dtype; returns (Sp, Hp) in out_dtype."""
    Sp, Hp = xp.shape
    Fp, TF = plan.Fp, plan.TF
    nb = jnp.dtype(plan.compute_dtype).itemsize
    cost = pl.CostEstimate(
        flops=4 * Sp * Hp * Fp,
        transcendentals=0,
        bytes_accessed=(Sp * Hp * nb + 2 * Hp * Fp * nb + (Fp + Hp) * nb
                        + Sp * Hp * jnp.dtype(out_dtype).itemsize),
    )

    if plan.resident:
        return pl.pallas_call(
            _mlp_resident_kernel,
            out_shape=jax.ShapeDtypeStruct((Sp, Hp), out_dtype),
            grid=(Sp // ts,),
            in_specs=[
                pl.BlockSpec((ts, Hp), lambda i: (i, 0)),    # x: new tile per i
                pl.BlockSpec((Hp, Fp), lambda i: (0, 0)),    # w1: resident
                pl.BlockSpec((1, Fp), lambda i: (0, 0)),     # b1: resident
                pl.BlockSpec((Fp, Hp), lambda i: (0, 0)),    # w2: resident
                pl.BlockSpec((1, Hp), lambda i: (0, 0)),     # b2: resident
            ],
            out_specs=pl.BlockSpec((ts, Hp), lambda i: (i, 0)),
            compiler_params=pltpu.CompilerParams(
                dimension_semantics=("parallel",),
                vmem_limit_bytes=plan.vmem_limit),
            cost_estimate=cost,
        )(xp, w1p, b1p, w2p, b2p)

    kt = Fp // TF
    return pl.pallas_call(
        _make_stream_kernel(TF),
        out_shape=jax.ShapeDtypeStruct((Sp, Hp), out_dtype),
        grid=(Sp // ts, kt),
        in_specs=[
            pl.BlockSpec((ts, Hp), lambda i, k: (i, 0)),       # x tile
            pl.BlockSpec((1, Hp, TF), lambda i, k: (k, 0, 0)), # w1 chunk (contiguous)
            pl.BlockSpec((1, Fp), lambda i, k: (0, 0)),        # b1: resident
            pl.BlockSpec((TF, Hp), lambda i, k: (k, 0)),       # w2 row chunk
            pl.BlockSpec((1, Hp), lambda i, k: (0, 0)),        # b2: resident
        ],
        out_specs=pl.BlockSpec((ts, Hp), lambda i, k: (i, 0)),  # resident over k
        scratch_shapes=[pltpu.VMEM((ts, Hp), jnp.float32)],
        compiler_params=pltpu.CompilerParams(
            dimension_semantics=("parallel", "arbitrary"),
            vmem_limit_bytes=plan.vmem_limit),
        cost_estimate=cost,
    )(xp, w1p, b1p, w2p, b2p)


def _seq_plan(S, ts_max):
    Sp0 = _round_up(S, 8)
    ts = min(ts_max, Sp0)
    # v7x megacore: give the 'parallel' seq axis >= 2 tiles whenever possible.
    if Sp0 >= 16:
        ts = min(ts, _round_up(-(-Sp0 // 2), 8))
    Sp = _round_up(Sp0, ts)
    return ts, Sp


class CheckpointWrapper:
    """JAX analogue of torch.distributed CheckpointWrapper: forward values are
    identical to the wrapped module; jax.checkpoint (remat) just means the
    intermediates are recomputed in backward instead of saved.

    The wrapped module here is a 2-layer MLP (relu(x@W1+b1)@W2+b2) implemented
    as a Pallas TPU kernel."""

    def __init__(self, params, hidden, ffn, *, compute_dtype=jnp.bfloat16,
                 ts_max=512, tf_max=2048, force_stream=False):
        self.plan = plan_mlp(hidden, ffn, compute_dtype=compute_dtype,
                             ts_max=ts_max, tf_max=tf_max,
                             force_stream=force_stream)
        # Pad + cast once at construction, not per forward / per remat replay.
        self._params = prepare_params(params, self.plan)
        # TODO(synk): offload_to_cpu (save_on_cpu), reentrant/non-reentrant
        #             distinction, and the state_dict prefix hooks have no
        #             Pallas/JAX-kernel equivalent; forward values are identical.
        # TODO(synk): pallas_call has no custom VJP here, so training through
        #             jax.grad would need explicit backward kernels.

    def __call__(self, x):
        S, H = x.shape
        plan = self.plan
        ts, Sp = _seq_plan(S, plan.ts_max)
        # Pad + cast x OUTSIDE the remat region so the copy is not replayed.
        xp = jnp.zeros((Sp, plan.Hp), plan.compute_dtype
                       ).at[:S, :H].set(x.astype(plan.compute_dtype))
        fwd = jax.checkpoint(partial(_mlp_pallas_padded, plan=plan, ts=ts,
                                     out_dtype=x.dtype))
        yp = fwd(xp, *self._params)
        return yp[:S, :H]


def make_params(key, hidden, ffn, dtype=jnp.float32):
    k1, k2, k3, k4 = jax.random.split(key, 4)
    w1 = jax.random.normal(k1, (hidden, ffn), dtype) * (1.0 / hidden) ** 0.5
    b1 = jax.random.normal(k2, (1, ffn), dtype) * 0.01
    w2 = jax.random.normal(k3, (ffn, hidden), dtype) * (1.0 / ffn) ** 0.5
    b2 = jax.random.normal(k4, (1, hidden), dtype) * 0.01
    return (w1, b1, w2, b2)


def _reference(x, params, compute_dtype):
    """Same math / same cast points as the kernel, in plain jnp (f32 accum)."""
    w1, b1, w2, b2 = params
    c = compute_dtype
    h = jnp.dot(x.astype(c), w1.astype(c), preferred_element_type=jnp.float32)
    h = jnp.maximum(h + b1.astype(c).astype(jnp.float32), 0.0)
    o = jnp.dot(h.astype(c), w2.astype(c), preferred_element_type=jnp.float32)
    return o + b2.astype(c).astype(jnp.float32)


def _check(seq, hidden, ffn, **kw):
    key = jax.random.PRNGKey(0)
    kx, kp = jax.random.split(key)
    x = jax.random.normal(kx, (seq, hidden), jnp.float32)
    params = make_params(kp, hidden, ffn)

    wrapper = CheckpointWrapper(params, hidden, ffn, **kw)
    y = jax.jit(wrapper.__call__)(x)
    jax.block_until_ready(y)

    ref = _reference(x, params, wrapper.plan.compute_dtype)
    assert y.shape == (seq, hidden)
    assert y.dtype == x.dtype
    err = float(jnp.max(jnp.abs(y.astype(jnp.float32) - ref)))
    assert err < 1e-2, err


if __name__ == "__main__":
    # Primary small demo shape (weights VMEM-resident, H=32 padded to 128).
    _check(seq=8, hidden=32, ffn=128)
    # Unaligned shapes: exercises seq / hidden / ffn padding (resident regime).
    _check(seq=13, hidden=40, ffn=200)
    # Force the streaming (k-tiled) regime: 2 FFN chunks, 2 seq tiles.
    _check(seq=40, hidden=40, ffn=200, force_stream=True, tf_max=128)
    print("KERNEL_OK")
</pallas_src>

<mosaic_0001>
module attributes {stable_mosaic.version = 11 : i64} {
  func.func @_mlp_resident_kernel(%arg0: i32, %arg1: memref<8x128xbf16, #tpu.memory_space<vmem>>, %arg2: memref<128x128xbf16, #tpu.memory_space<vmem>>, %arg3: memref<1x128xbf16, #tpu.memory_space<vmem>>, %arg4: memref<128x128xbf16, #tpu.memory_space<vmem>>, %arg5: memref<1x128xbf16, #tpu.memory_space<vmem>>, %arg6: memref<8x128xf32, #tpu.memory_space<vmem>>) attributes {dimension_semantics = [#tpu.dimension_semantics<parallel>], iteration_bounds = array<i64: 1>, scalar_prefetch = 0 : i64, scratch_operands = 0 : i64, tpu.core_type = #tpu.core_type<tc>, window_params = [{transform_indices = @transform_0, window_bounds = array<i64: 8, 128>}, {pipeline_mode = #tpu.pipeline_mode<synchronous>, transform_indices = @transform_1, window_bounds = array<i64: 128, 128>}, {pipeline_mode = #tpu.pipeline_mode<synchronous>, transform_indices = @transform_2, window_bounds = array<i64: 1, 128>}, {pipeline_mode = #tpu.pipeline_mode<synchronous>, transform_indices = @transform_3, window_bounds = array<i64: 128, 128>}, {pipeline_mode = #tpu.pipeline_mode<synchronous>, transform_indices = @transform_4, window_bounds = array<i64: 1, 128>}, {transform_indices = @transform_5, window_bounds = array<i64: 8, 128>}]} {
    %c0 = arith.constant 0 : index
    %c0_0 = arith.constant 0 : index
    %0 = vector.load %arg1[%c0, %c0_0] : memref<8x128xbf16, #tpu.memory_space<vmem>>, vector<8x128xbf16>
    %c0_1 = arith.constant 0 : index
    %c0_2 = arith.constant 0 : index
    %1 = vector.load %arg2[%c0_1, %c0_2] : memref<128x128xbf16, #tpu.memory_space<vmem>>, vector<128x128xbf16>
    %cst = arith.constant dense<0.000000e+00> : vector<8x128xf32>
    %2 = tpu.matmul %0, %1, %cst {dimension_numbers = #tpu.dot_dimension_numbers<[1], [0], [0], [1], [0, 0, 1, 1], [], []>} : vector<8x128xbf16>, vector<128x128xbf16>, vector<8x128xf32> -> vector<8x128xf32>
    %c0_3 = arith.constant 0 : index
    %c0_4 = arith.constant 0 : index
    %3 = vector.load %arg3[%c0_3, %c0_4] : memref<1x128xbf16, #tpu.memory_space<vmem>>, vector<1x128xbf16>
    %4 = arith.extf %3 : vector<1x128xbf16> to vector<1x128xf32>
    %5 = vector.broadcast %4 : vector<1x128xf32> to vector<8x128xf32>
    %6 = arith.addf %2, %5 : vector<8x128xf32>
    %cst_5 = arith.constant 0.000000e+00 : f32
    %7 = vector.broadcast %cst_5 : f32 to vector<8x128xf32>
    %8 = arith.maximumf %6, %7 : vector<8x128xf32>
    %9 = arith.truncf %8 : vector<8x128xf32> to vector<8x128xbf16>
    %c0_6 = arith.constant 0 : index
    %c0_7 = arith.constant 0 : index
    %10 = vector.load %arg4[%c0_6, %c0_7] : memref<128x128xbf16, #tpu.memory_space<vmem>>, vector<128x128xbf16>
    %cst_8 = arith.constant dense<0.000000e+00> : vector<8x128xf32>
    %11 = tpu.matmul %9, %10, %cst_8 {dimension_numbers = #tpu.dot_dimension_numbers<[1], [0], [0], [1], [0, 0, 1, 1], [], []>} : vector<8x128xbf16>, vector<128x128xbf16>, vector<8x128xf32> -> vector<8x128xf32>
    %c0_9 = arith.constant 0 : index
    %c0_10 = arith.constant 0 : index
    %12 = vector.load %arg5[%c0_9, %c0_10] : memref<1x128xbf16, #tpu.memory_space<vmem>>, vector<1x128xbf16>
    %13 = arith.extf %12 : vector<1x128xbf16> to vector<1x128xf32>
    %14 = vector.broadcast %13 : vector<1x128xf32> to vector<8x128xf32>
    %15 = arith.addf %11, %14 : vector<8x128xf32>
    %c0_11 = arith.constant 0 : index
    %c0_12 = arith.constant 0 : index
    %16 = vector.load %arg6[%c0_11, %c0_12] : memref<8x128xf32, #tpu.memory_space<vmem>>, vector<8x128xf32>
    tpu.vector_store %arg6[%c0_11, %c0_12], %15 {strides = array<i32>} : memref<8x128xf32, #tpu.memory_space<vmem>>, vector<8x128xf32>,
    return
  }
  func.func @transform_0(%arg0: i32) -> (i32, i32) {
    %c0_i32 = arith.constant 0 : i32
    %c0_i32_0 = arith.constant 0 : i32
    return %arg0, %c0_i32 : i32, i32
  }
  func.func @transform_1(%arg0: i32) -> (i32, i32) {
    %c0_i32 = arith.constant 0 : i32
    %c0_i32_0 = arith.constant 0 : i32
    %c0_i32_1 = arith.constant 0 : i32
    return %c0_i32, %c0_i32_0 : i32, i32
  }
  func.func @transform_2(%arg0: i32) -> (i32, i32) {
    %c0_i32 = arith.constant 0 : i32
    %c0_i32_0 = arith.constant 0 : i32
    %c0_i32_1 = arith.constant 0 : i32
    return %c0_i32, %c0_i32_0 : i32, i32
  }
  func.func @transform_3(%arg0: i32) -> (i32, i32) {
    %c0_i32 = arith.constant 0 : i32
    %c0_i32_0 = arith.constant 0 : i32
    %c0_i32_1 = arith.constant 0 : i32
    return %c0_i32, %c0_i32_0 : i32, i32
  }
  func.func @transform_4(%arg0: i32) -> (i32, i32) {
    %c0_i32 = arith.constant 0 : i32
    %c0_i32_0 = arith.constant 0 : i32
    %c0_i32_1 = arith.constant 0 : i32
    return %c0_i32, %c0_i32_0 : i32, i32
  }
  func.func @transform_5(%arg0: i32) -> (i32, i32) {
    %c0_i32 = arith.constant 0 : i32
    %c0_i32_0 = arith.constant 0 : i32
    return %arg0, %c0_i32 : i32, i32
  }
}

</mosaic_0001>

<llo_original>
// kernel: checkpoint.1
$region0: #{checkpoint.1}
  #allocation0 [shape = 'u32[]', space=smem, size = 0x4, offset = 0x4, fixed_abs, tag = 'smem constant byte address 0x4 - core index']
  #allocation1 [shape = 'u32[144,128]{1,0:T(1,128)}', space=vmem, size = 0x12000, scoped, tag = 'internal scratch']
  %s0 = inlined_call_operand.vmem [shape: bf16[8,128], index: 0, kind: input, shape index: {}]
  %s1 = inlined_call_operand.hbm [shape: bf16[128,128], index: 1, kind: input, shape index: {}]
  %s2 = inlined_call_operand.vmem [shape: bf16[1,128], index: 2, kind: input, shape index: {}]
  %s3 = inlined_call_operand.hbm [shape: bf16[128,128], index: 3, kind: input, shape index: {}]
  %s4 = inlined_call_operand.vmem [shape: bf16[1,128], index: 4, kind: input, shape index: {}]
  %s5 = inlined_call_operand.hbm [shape: f32[8,128], index: 5, kind: output, shape index: {}]
  %s6 = sld [smem:[#allocation0]]
  $region38: #{checkpoint.1} parent=0
    _
  %s8 = ssub.s32 1, %s6
  %s9 = scalar_select 0, %s8, %s6
  $region1: #{checkpoint.1} parent=0
    #allocation2 [shape = 'u8[32768]{0}', space=vmem, size = 0x8000, scoped, tag = 'input window, operand 1, single buffered']
    #allocation3 [shape = 's32[1]{0}', space=sflag, size = 0x4, scoped, tag = 'scoped memory for checkpoint.1']
    #allocation4 [shape = 's32[1]{0}', space=sflag, size = 0x4, scoped, tag = 'scoped memory for checkpoint.1']
    #allocation5 [shape = 'u8[32768]{0}', space=vmem, size = 0x8000, scoped, tag = 'input window, operand 3, single buffered']
    #allocation6 [shape = 's32[1]{0}', space=sflag, size = 0x4, scoped, tag = 'scoped memory for checkpoint.1']
    #allocation7 [shape = 'u8[4096]{0}', space=vmem, size = 0x1000, scoped, tag = 'output window, operand 0, single buffered']
    %10 = vsyncpa [#allocation3], 0
    %11 = vsyncpa [#allocation6], 0
    %12 = vsyncpa [#allocation4], 0
    // Predicated region
    $region2: #{checkpoint.1} parent=1 // pred_check
      _
    $region3: #{checkpoint.1} parent=1 // pred_check_branch
      %14 = sbr.rel (0) target = $region5
    $region4: #{checkpoint.1} parent=1 // pred_region
      _
    $region5: #{checkpoint.1} parent=1 // pred_fallthru
      _
    // Predicated region
    $region6: #{checkpoint.1} parent=1 // pred_check
      _
    $region7: #{checkpoint.1} parent=1 // pred_check_branch
      %16 = sbr.rel (0) target = $region9
    $region8: #{checkpoint.1} parent=1 // pred_region
      %s18 = ssub.s32 1024, 1024
      %19 = vsyncadd [#allocation3], %s18
      %s20 = sshll.u32 [#allocation2], 4
      %s21 = int_to_ptr.vmem [resolvable:$true] %s20
      %26 = dma.hbm_to_vmem [thread:$0]  %s1, 1024, %s21, [#allocation3], 64, 64, 4
    $region9: #{checkpoint.1} parent=1 // pred_fallthru
      _
    // Predicated region
    $region10: #{checkpoint.1} parent=1 // pred_check
      _
    $region11: #{checkpoint.1} parent=1 // pred_check_branch
      %28 = sbr.rel (0) target = $region13
    $region12: #{checkpoint.1} parent=1 // pred_region
      _
    $region13: #{checkpoint.1} parent=1 // pred_fallthru
      _
    // Predicated region
    $region14: #{checkpoint.1} parent=1 // pred_check
      _
    $region15: #{checkpoint.1} parent=1 // pred_check_branch
      %30 = sbr.rel (0) target = $region17
    $region16: #{checkpoint.1} parent=1 // pred_region
      %s32 = ssub.s32 1024, 1024
      %33 = vsyncadd [#allocation6], %s32
      %s34 = sshll.u32 [#allocation5], 4
      %s35 = int_to_ptr.vmem [resolvable:$true] %s34
      %40 = dma.hbm_to_vmem [thread:$0]  %s3, 1024, %s35, [#allocation6], 64, 64, 4
    $region17: #{checkpoint.1} parent=1 // pred_fallthru
      _
    // Predicated region
    $region18: #{checkpoint.1} parent=1 // pred_check
      _
    $region19: #{checkpoint.1} parent=1 // pred_check_branch
      %42 = sbr.rel (0) target = $region21
    $region20: #{checkpoint.1} parent=1 // pred_region
      _
    $region21: #{checkpoint.1} parent=1 // pred_fallthru
      _
    // Predicated region
    $region22: #{checkpoint.1} parent=1 // pred_check
      _
    $region23: #{checkpoint.1} parent=1 // pred_check_branch
      %44 = sbr.rel (0) target = $region25
    $region24: #{checkpoint.1} parent=1 // pred_region
      %45 = dma.done [#allocation3], 1024
    $region25: #{checkpoint.1} parent=1 // pred_fallthru
      _
    // Predicated region
    $region26: #{checkpoint.1} parent=1 // pred_check
      _
    $region27: #{checkpoint.1} parent=1 // pred_check_branch
      %47 = sbr.rel (0) target = $region29
    $region28: #{checkpoint.1} parent=1 // pred_region
      %48 = dma.done [#allocation6], 1024
    $region29: #{checkpoint.1} parent=1 // pred_fallthru
      _
    %v50 = vld [vmem:[%s0] sm:$0xf]
    %v51 = vld [vmem:[#allocation2] sm:$0xf]
    %v52 = vld [vmem:[#allocation2 + $0x4] sm:$0xf]
    %v53 = vld [vmem:[#allocation2 + $0x8] sm:$0xf]
    %v54 = vld [vmem:[#allocation2 + $0xc] sm:$0xf]
    %v55 = vld [vmem:[#allocation2 + $0x10] sm:$0xf]
    %v56 = vld [vmem:[#allocation2 + $0x14] sm:$0xf]
    %v57 = vld [vmem:[#allocation2 + $0x18] sm:$0xf]
    %v58 = vld [vmem:[#allocation2 + $0x1c] sm:$0xf]
    %v59 = vld [vmem:[#allocation2 + $0x20] sm:$0xf]
    %v60 = vld [vmem:[#allocation2 + $0x24] sm:$0xf]
    %v61 = vld [vmem:[#allocation2 + $0x28] sm:$0xf]
    %v62 = vld [vmem:[#allocation2 + $0x2c] sm:$0xf]
    %v63 = vld [vmem:[#allocation2 + $0x30] sm:$0xf]
    %v64 = vld [vmem:[#allocation2 + $0x34] sm:$0xf]
    %v65 = vld [vmem:[#allocation2 + $0x38] sm:$0xf]
    %v66 = vld [vmem:[#allocation2 + $0x3c] sm:$0xf]
    %v67 = vld [vmem:[%s2] sm:$0x1]
    %v68 = vunpack.c.l.bf16 %v67
    %v69 = vlaneseq
    %v70 = vshrl.u32 %v69, 7
    %v71 = vsub.s32 0, %v70
    %v72 = vrot.slane %v68, %v71
    %v89 = vunpack.c.l.b16 %v51
    %v90 = vunpack.c.l.b16 %v52
    %v91 = vunpack.c.l.b16 %v53
    %v92 = vunpack.c.l.b16 %v54
    %v93 = vunpack.c.l.b16 %v55
    %v94 = vunpack.c.l.b16 %v56
    %v95 = vunpack.c.l.b16 %v57
    %v96 = vunpack.c.l.b16 %v58
    %v97 = vunpack.c.l.b16 %v59
    %v98 = vunpack.c.l.b16 %v60
    %v99 = vunpack.c.l.b16 %v61
    %v100 = vunpack.c.l.b16 %v62
    %v101 = vunpack.c.l.b16 %v63
    %v102 = vunpack.c.l.b16 %v64
    %v103 = vunpack.c.l.b16 %v65
    %v104 = vunpack.c.l.b16 %v66
    %v105 = vpack.c.b16 %v90, %v89
    %v106 = vpack.c.b16 %v92, %v91
    %v107 = vpack.c.b16 %v94, %v93
    %v108 = vpack.c.b16 %v96, %v95
    %v109 = vpack.c.b16 %v98, %v97
    %v110 = vpack.c.b16 %v100, %v99
    %v111 = vpack.c.b16 %v102, %v101
    %v112 = vpack.c.b16 %v104, %v103
    %121 = vmatprep.subr.bf16.mxu0 0
    %122 = vmatpush1.bf16.msra.mxu0 %v112
    %123 = vmatprep.subr.bf16.mxu0 0
    %124 = vmatpush1.bf16.msra.mxu0 %v111
    %125 = vmatprep.subr.bf16.mxu0 0
    %126 = vmatpush1.bf16.msra.mxu0 %v110
    %127 = vmatprep.subr.bf16.mxu0 0
    %128 = vmatpush1.bf16.msra.mxu0 %v109
    %129 = vmatprep.subr.bf16.mxu0 0
    %130 = vmatpush1.bf16.msra.mxu0 %v108
    %131 = vmatprep.subr.bf16.mxu0 0
    %132 = vmatpush1.bf16.msra.mxu0 %v107
    %133 = vmatprep.subr.bf16.mxu0 0
    %134 = vmatpush1.bf16.msra.mxu0 %v106
    %135 = vmatprep.subr.bf16.mxu0 0
    %136 = vmatpush1.bf16.msra.mxu0 %v105
    %137 = vmatprep.subr.bf16.mxu0 0
    %138 = vmatpush2.bf16.msra.mxu0 0
    %139 = vmatprep.subr.bf16.mxu0 0
    %140 = vmatpush2.bf16.msra.mxu0 0
    %141 = vmatprep.subr.bf16.mxu0 0
    %142 = vmatpush2.bf16.msra.mxu0 0
    %143 = vmatprep.subr.bf16.mxu0 0
    %144 = vmatpush2.bf16.msra.mxu0 0
    %145 = vmatprep.subr.bf16.mxu0 0
    %146 = vmatpush2.bf16.msra.mxu0 0
    %147 = vmatprep.subr.bf16.mxu0 0
    %148 = vmatpush2.bf16.msra.mxu0 0
    %149 = vmatprep.subr.bf16.mxu0 0
    %150 = vmatpush2.bf16.msra.mxu0 0
    %151 = vmatprep.subr.bf16.mxu0 0
    %152 = vmatpush2.bf16.msra.mxu0 0
    %153 = vmatprep.mubr.bf16.mxu0 0
    %154 = vmatmul.mubr.bf16.gmra.mxu0 %v50
    %v155 = vpop.f32.mrf.mxu0
    %v156 = vadd.f32 %v72, %v155
    %v157 = vpop.f32.mrf.mxu0
    %v158 = vpop.f32.mrf.mxu0
    %v159 = vpop.f32.mrf.mxu0
    %160 = vdwg.mxu0
    %v161 = vmax.f32 %v156, 0.0
    %v162 = vpack.c.bf16 %v161, %v161
    %v163 = vld [vmem:[#allocation5] sm:$0xf]
    %v164 = vld [vmem:[#allocation5 + $0x4] sm:$0xf]
    %v165 = vld [vmem:[#allocation5 + $0x8] sm:$0xf]
    %v166 = vld [vmem:[#allocation5 + $0xc] sm:$0xf]
    %v167 = vld [vmem:[#allocation5 + $0x10] sm:$0xf]
    %v168 = vld [vmem:[#allocation5 + $0x14] sm:$0xf]
    %v169 = vld [vmem:[#allocation5 + $0x18] sm:$0xf]
    %v170 = vld [vmem:[#allocation5 + $0x1c] sm:$0xf]
    %v171 = vld [vmem:[#allocation5 + $0x20] sm:$0xf]
    %v172 = vld [vmem:[#allocation5 + $0x24] sm:$0xf]
    %v173 = vld [vmem:[#allocation5 + $0x28] sm:$0xf]
    %v174 = vld [vmem:[#allocation5 + $0x2c] sm:$0xf]
    %v175 = vld [vmem:[#allocation5 + $0x30] sm:$0xf]
    %v176 = vld [vmem:[#allocation5 + $0x34] sm:$0xf]
    %v177 = vld [vmem:[#allocation5 + $0x38] sm:$0xf]
    %v178 = vld [vmem:[#allocation5 + $0x3c] sm:$0xf]
    %v179 = vld [vmem:[%s4] sm:$0x1]
    %v180 = vunpack.c.l.bf16 %v179
    %v181 = vlaneseq
    %v182 = vshrl.u32 %v181, 7
    %v183 = vsub.s32 0, %v182
    %v184 = vrot.slane %v180, %v183
    %v201 = vunpack.c.l.b16 %v163
    %v202 = vunpack.c.l.b16 %v164
    %v203 = vunpack.c.l.b16 %v165
    %v204 = vunpack.c.l.b16 %v166
    %v205 = vunpack.c.l.b16 %v167
    %v206 = vunpack.c.l.b16 %v168
    %v207 = vunpack.c.l.b16 %v169
    %v208 = vunpack.c.l.b16 %v170
    %v209 = vunpack.c.l.b16 %v171
    %v210 = vunpack.c.l.b16 %v172
    %v211 = vunpack.c.l.b16 %v173
    %v212 = vunpack.c.l.b16 %v174
    %v213 = vunpack.c.l.b16 %v175
    %v214 = vunpack.c.l.b16 %v176
    %v215 = vunpack.c.l.b16 %v177
    %v216 = vunpack.c.l.b16 %v178
    %v217 = vpack.c.b16 %v202, %v201
    %v218 = vpack.c.b16 %v204, %v203
    %v219 = vpack.c.b16 %v206, %v205
    %v220 = vpack.c.b16 %v208, %v207
    %v221 = vpack.c.b16 %v210, %v209
    %v222 = vpack.c.b16 %v212, %v211
    %v223 = vpack.c.b16 %v214, %v213
    %v224 = vpack.c.b16 %v216, %v215
    %233 = vmatprep.subr.bf16.mxu0 0
    %234 = vmatpush1.bf16.msra.mxu0 %v224
    %235 = vmatprep.subr.bf16.mxu0 0
    %236 = vmatpush1.bf16.msra.mxu0 %v223
    %237 = vmatprep.subr.bf16.mxu0 0
    %238 = vmatpush1.bf16.msra.mxu0 %v222
    %239 = vmatprep.subr.bf16.mxu0 0
    %240 = vmatpush1.bf16.msra.mxu0 %v221
    %241 = vmatprep.subr.bf16.mxu0 0
    %242 = vmatpush1.bf16.msra.mxu0 %v220
    %243 = vmatprep.subr.bf16.mxu0 0
    %244 = vmatpush1.bf16.msra.mxu0 %v219
    %245 = vmatprep.subr.bf16.mxu0 0
    %246 = vmatpush1.bf16.msra.mxu0 %v218
    %247 = vmatprep.subr.bf16.mxu0 0
    %248 = vmatpush1.bf16.msra.mxu0 %v217
    %249 = vmatprep.subr.bf16.mxu0 0
    %250 = vmatpush2.bf16.msra.mxu0 0
    %251 = vmatprep.subr.bf16.mxu0 0
    %252 = vmatpush2.bf16.msra.mxu0 0
    %253 = vmatprep.subr.bf16.mxu0 0
    %254 = vmatpush2.bf16.msra.mxu0 0
    %255 = vmatprep.subr.bf16.mxu0 0
    %256 = vmatpush2.bf16.msra.mxu0 0
    %257 = vmatprep.subr.bf16.mxu0 0
    %258 = vmatpush2.bf16.msra.mxu0 0
    %259 = vmatprep.subr.bf16.mxu0 0
    %260 = vmatpush2.bf16.msra.mxu0 0
    %261 = vmatprep.subr.bf16.mxu0 0
    %262 = vmatpush2.bf16.msra.mxu0 0
    %263 = vmatprep.subr.bf16.mxu0 0
    %264 = vmatpush2.bf16.msra.mxu0 0
    %265 = vmatprep.mubr.bf16.mxu0 0
    %266 = vmatmul.mubr.bf16.gmra.mxu0 %v162
    %v267 = vpop.f32.mrf.mxu0
    %v268 = vadd.f32 %v184, %v267
    %v269 = vpop.f32.mrf.mxu0
    %v270 = vpop.f32.mrf.mxu0
    %v271 = vpop.f32.mrf.mxu0
    %272 = vdwg.mxu0
    %273 = vst [vmem:[#allocation7] sm:$0xff] %v268
    // Predicated region
    $region30: #{checkpoint.1} parent=1 // pred_check
      _
    $region31: #{checkpoint.1} parent=1 // pred_check_branch
      %275 = sbr.rel (0) target = $region33
    $region32: #{checkpoint.1} parent=1 // pred_region
      %s277 = ssub.s32 128, 128
      %278 = vsyncadd [#allocation4], %s277
      %s280 = sshll.u32 [#allocation7], 4
      %s281 = int_to_ptr.vmem [resolvable:$true] %s280
      %283 = dma.vmem_to_hbm [thread:$0]  %s281, 128, %s5, [#allocation4]
    $region33: #{checkpoint.1} parent=1 // pred_fallthru
      _
    // Predicated region
    $region34: #{checkpoint.1} parent=1 // pred_check
      _
    $region35: #{checkpoint.1} parent=1 // pred_check_branch
      %285 = sbr.rel (0) target = $region37
    $region36: #{checkpoint.1} parent=1 // pred_region
      %286 = dma.done [#allocation4], 128
    $region37: #{checkpoint.1} parent=1 // pred_fallthru
      _
    %287 = vsyncpa [#allocation3], 1
    %288 = vsyncpa [#allocation6], 1
    %289 = vsyncpa [#allocation4], 1

</llo_original>
